<compile_context>
chip_gen: v5e
topology: v5e:2x2
jax: 0.10.0
libtpu: 0.0.40
codegen_flags: <defaults>
</compile_context>

<pallas_src>
import functools

import jax
import jax.numpy as jnp
from jax.experimental import pallas as pl
from jax.experimental.pallas import tpu as pltpu


_OUT_SUBLANES = 8
_OUT_LANES = 128
_MIB = 1024 * 1024


def _cdiv(a, b):
    return -(-a // b)


def _round_up(a, b):
    return _cdiv(a, b) * b


def _device_kind():
    try:
        return jax.devices()[0].device_kind.lower()
    except Exception:
        return ""


def _label_smooth_loss_kernel(tgt_ref, logit_ref, out_ref, acc_ref, *,
                              n_cols, ignore_index, confidence, smooth_val,
                              tile_c, needs_col_mask, compute_dtype):
    """acc += where(tgt==ignore, 0, logit) * where(class==tgt, conf, smooth); -sum on last step."""
    i = pl.program_id(1)          # row tile within group (reduction)
    j = pl.program_id(2)          # class tile (reduction, innermost)
    ni = pl.num_programs(1)
    nj = pl.num_programs(2)

    # Zero the full-shape accumulator at the start of each row group.
    @pl.when(jnp.logical_and(i == 0, j == 0))
    def _():
        acc_ref[...] = jnp.zeros_like(acc_ref)

    lg = logit_ref[...]
    if lg.dtype != jnp.dtype(compute_dtype):
        lg = lg.astype(compute_dtype)          # f32 upcast only where needed (v5e / odd dtypes)
    tgt = tgt_ref[...]                         # (TR, 1) int32; padded rows hold ignore_index

    # (1, TC) class ids -- no full-tile int32 iota materialized per step.
    class_ids = j * tile_c + jax.lax.broadcasted_iota(jnp.int32, (1, tile_c), 1)
    onehot = class_ids == tgt                  # (TR, TC) bool via 2-way broadcast

    zero = jnp.zeros((), compute_dtype)
    conf = jnp.asarray(confidence, dtype=compute_dtype)
    smv = jnp.asarray(smooth_val, dtype=compute_dtype)

    # Row mask (ignore_index + padded/clamped rows) as one NaN-safe select on the logit itself.
    lg_m = jnp.where(tgt != ignore_index, lg, zero)           # (TR, TC)
    w = jnp.where(onehot, conf, smv)                          # constant select, no arithmetic
    contrib = w * lg_m                                        # (TR, TC)

    if not needs_col_mask:
        # C is an exact multiple of tile_c (or tile_c == C): no padded columns anywhere.
        acc_ref[...] += contrib
    else:
        # Only the last class tile carries padded (garbage) columns; interior tiles skip the mask.
        @pl.when(j != nj - 1)
        def _():
            acc_ref[...] += contrib

        @pl.when(j == nj - 1)
        def _():
            acc_ref[...] += jnp.where(class_ids < n_cols, contrib, zero)

    # Single cross-lane/cross-sublane collapse + output store per group, on the last step.
    @pl.when(jnp.logical_and(i == ni - 1, j == nj - 1))
    def _():
        total = -jnp.sum(acc_ref[...])
        out_ref[...] = jnp.broadcast_to(total, out_ref.shape).astype(out_ref.dtype)


def cross_entropy_label_smoothing_loss(logit, target, *, num_classes, ignore_index,
                                       smoothing=0.1, tile_rows=None, tile_c=None,
                                       target_tile_bytes=None):
    """Pallas wrapper. logit: (N, C) float (log-probs), target: (N,) int. Returns scalar f32."""
    if smoothing <= 0.0:
        # TODO(synk): smoothing == 0 branch (F.cross_entropy, i.e. a fresh log_softmax) not
        # implemented; the module default (smoothing=0.1) path is covered.
        raise NotImplementedError("smoothing == 0 path not implemented")

    n, c = logit.shape
    itemsize = jnp.dtype(logit.dtype).itemsize
    row_mult = {4: 8, 2: 16, 1: 32}.get(itemsize, 8)   # sublane packing of the logit dtype

    kind = _device_kind()
    is_v7 = ("v7" in kind) or ("7x" in kind)           # 2 TensorCores / 64 MiB VMEM per TC
    is_v5 = "v5" in kind                               # no bf16 VALU
    num_cores = 2 if is_v7 else 1

    # bf16 stays bf16 through the select/mul on v6e/v7x; accumulate is f32 either way.
    if logit.dtype == jnp.bfloat16 and not is_v5:
        compute_dtype = jnp.bfloat16
    else:
        compute_dtype = jnp.float32

    # ---- tile sizing: aim for 4-8 MiB of logit per block (amortizes ~0.35us/step) ------------
    if target_tile_bytes is None:
        target_tile_bytes = (4 if is_v7 else 8) * _MIB
    if c * itemsize * row_mult <= target_tile_bytes:
        d_tile_c = c
        d_tile_rows = max(row_mult,
                          (target_tile_bytes // (c * itemsize)) // row_mult * row_mult)
        d_tile_rows = min(d_tile_rows, _round_up(n, row_mult))
    else:
        d_tile_rows = row_mult
        d_tile_c = max(128, (target_tile_bytes // (row_mult * itemsize)) // 128 * 128)
        d_tile_c = min(d_tile_c, _round_up(c, 128))
        if d_tile_c >= c:
            d_tile_c = c
    tile_rows = d_tile_rows if tile_rows is None else tile_rows
    tile_c = d_tile_c if tile_c is None else tile_c
    if tile_rows % row_mult != 0:
        raise ValueError(f"tile_rows must be a multiple of {row_mult}")
    if tile_c != c and tile_c % 128 != 0:
        raise ValueError("tile_c must be a multiple of 128 or equal to C")

    n_row_blocks = _cdiv(n, tile_rows)
    n_col_blocks = _cdiv(c, tile_c)
    needs_col_mask = (c % tile_c) != 0

    # Leading row-group axis: real 2-TC sharding on v7x (CORE_PARALLEL); single group elsewhere.
    num_groups = num_cores if n_row_blocks >= num_cores else 1
    row_blocks_per_group = _cdiv(n_row_blocks, num_groups)

    # Pad target with ignore_index up to the full padded grid extent so no in-kernel row-range
    # check is needed (padded / clamped row blocks mask themselves via tgt == ignore_index).
    total_rows = num_groups * row_blocks_per_group * tile_rows
    target2d = target.astype(jnp.int32).reshape(n, 1)
    if total_rows > n:
        pad = jnp.full((total_rows - n, 1), ignore_index, dtype=jnp.int32)
        target2d = jnp.concatenate([target2d, pad], axis=0)

    # NOTE: smooth_val intentionally uses the caller's num_classes, exactly like the PyTorch
    # module (the fill value is smoothing/(num_classes-1) over all C columns); the in-kernel
    # class-range mask only guards tile padding beyond C.
    confidence = 1.0 - smoothing
    smooth_val = smoothing / (num_classes - 1)

    kernel = functools.partial(
        _label_smooth_loss_kernel,
        n_cols=c, ignore_index=ignore_index,
        confidence=confidence, smooth_val=smooth_val,
        tile_c=tile_c, needs_col_mask=needs_col_mask, compute_dtype=compute_dtype,
    )

    def _logit_row_block(g, i):
        # Clamp the DMA index; out-of-range logical row blocks are fully masked because their
        # (padded, ignore_index-filled) target block zeroes every row.
        return jnp.minimum(g * row_blocks_per_group + i, n_row_blocks - 1)

    # VMEM budget: double-buffered logit + target tiles, full-shape f32 accumulator, output
    # block(s).  Cap is generation-aware (64 MiB/TC physical on v7x, 128 MiB on v5e/v6e).
    vmem_needed = (2 * (tile_rows * tile_c * itemsize + tile_rows * 512)
                   + tile_rows * tile_c * 4
                   + 2 * _OUT_SUBLANES * _OUT_LANES * 4)
    vmem_cap = (44 if is_v7 else 96) * _MIB
    vmem_limit = int(min(max(2 * vmem_needed, 16 * _MIB), vmem_cap))

    group_sem = pltpu.CORE_PARALLEL if num_groups > 1 else pltpu.ARBITRARY

    out = pl.pallas_call(
        kernel,
        out_shape=jax.ShapeDtypeStruct((num_groups * _OUT_SUBLANES, _OUT_LANES), jnp.float32),
        grid_spec=pltpu.PrefetchScalarGridSpec(
            num_scalar_prefetch=0,
            grid=(num_groups, row_blocks_per_group, n_col_blocks),
            in_specs=[
                pl.BlockSpec((tile_rows, 1),
                             lambda g, i, j: (g * row_blocks_per_group + i, 0)),
                pl.BlockSpec((tile_rows, tile_c),
                             lambda g, i, j: (_logit_row_block(g, i), j)),
            ],
            out_specs=pl.BlockSpec((_OUT_SUBLANES, _OUT_LANES), lambda g, i, j: (g, 0)),
            scratch_shapes=[pltpu.VMEM((tile_rows, tile_c), jnp.float32)],
        ),
        compiler_params=pltpu.CompilerParams(
            dimension_semantics=(group_sem, pltpu.ARBITRARY, pltpu.ARBITRARY),
            vmem_limit_bytes=vmem_limit,
        ),
        cost_estimate=pl.CostEstimate(
            flops=5 * n * c,
            transcendentals=0,
            bytes_accessed=n * c * itemsize + total_rows * 4
                           + num_groups * _OUT_SUBLANES * _OUT_LANES * 4,
        ),
    )(target2d, logit)

    # Each group's (8,128) block is filled with its partial loss; take one element per group.
    return jnp.sum(out[::_OUT_SUBLANES, 0])


def _reference_loss(logit, target, *, num_classes, ignore_index, smoothing):
    """Pure-JAX reference mirroring the PyTorch forward (smoothing > 0 path)."""
    confidence = 1.0 - smoothing
    smooth_val = smoothing / (num_classes - 1)
    ls = jnp.full_like(logit.astype(jnp.float32), smooth_val)
    ls = ls.at[jnp.arange(logit.shape[0]), target].set(confidence)
    ls = jnp.where((target == ignore_index)[:, None], 0.0, ls)
    return jnp.sum(-ls * logit.astype(jnp.float32))


def _run_case(key, n, c, ignore_index, smoothing, **tile_kwargs):
    k1, k2 = jax.random.split(key)
    scores = jax.random.normal(k1, (n, c), dtype=jnp.float32)
    logit = jax.nn.log_softmax(scores, axis=-1)
    target = jax.random.randint(k2, (n,), 0, c, dtype=jnp.int32)
    # Force some ignored rows.
    target = target.at[1].set(ignore_index)
    if n > 5:
        target = target.at[5].set(ignore_index)

    loss = cross_entropy_label_smoothing_loss(
        logit, target, num_classes=c, ignore_index=ignore_index,
        smoothing=smoothing, **tile_kwargs)
    loss = jax.block_until_ready(loss)

    ref = _reference_loss(logit, target, num_classes=c,
                          ignore_index=ignore_index, smoothing=smoothing)
    assert jnp.allclose(loss, ref, rtol=1e-5, atol=1e-4), (loss, ref)
    return loss


if __name__ == "__main__":
    key = jax.random.PRNGKey(0)
    k1, k2, k3 = jax.random.split(key, 3)

    # Case 1: small aligned shapes (N=16, C=32), auto tiling, single tile.
    _run_case(k1, n=16, c=32, ignore_index=0, smoothing=0.1)

    # Case 2: ragged N (padded target rows masked via ignore_index), auto tiling.
    _run_case(k2, n=13, c=32, ignore_index=0, smoothing=0.1)

    # Case 3: explicit small tiles exercising multiple row tiles, C tiling with a partial
    #         (masked) last class tile, and the clamped out-of-range logit row block path
    #         (2 core-parallel groups on multi-TC chips, 1 group on v5e/v6e).
    _run_case(k3, n=21, c=200, ignore_index=0, smoothing=0.1, tile_rows=8, tile_c=128)

    print("KERNEL_OK")
</pallas_src>

<mosaic_0001>
module attributes {stable_mosaic.version = 11 : i64} {
  func.func @_label_smooth_loss_kernel(%arg0: i32, %arg1: i32, %arg2: i32, %arg3: memref<16x1xi32, #tpu.memory_space<vmem>>, %arg4: memref<16x32xf32, #tpu.memory_space<vmem>>, %arg5: memref<8x128xf32, #tpu.memory_space<vmem>>, %arg6: memref<16x32xf32, #tpu.memory_space<vmem>>) attributes {dimension_semantics = [#tpu.dimension_semantics<arbitrary>, #tpu.dimension_semantics<arbitrary>, #tpu.dimension_semantics<arbitrary>], iteration_bounds = array<i64: 1, 1, 1>, scalar_prefetch = 0 : i64, scratch_operands = 1 : i64, tpu.core_type = #tpu.core_type<tc>, window_params = [{transform_indices = @transform_0, window_bounds = array<i64: 16, 1>}, {transform_indices = @transform_1, window_bounds = array<i64: 16, 32>}, {transform_indices = @transform_2, window_bounds = array<i64: 8, 128>}]} {
    %c0_i32 = arith.constant 0 : i32
    %0 = arith.cmpi eq, %arg1, %c0_i32 : i32
    %c0_i32_0 = arith.constant 0 : i32
    %1 = arith.cmpi eq, %arg2, %c0_i32_0 : i32
    %2 = arith.andi %0, %1 : i1
    %3 = arith.extui %2 : i1 to i32
    %c0_i32_1 = arith.constant 0 : i32
    %4 = arith.cmpi ne, %3, %c0_i32_1 : i32
    scf.if %4 {
      %cst_15 = arith.constant 0.000000e+00 : f32
      %32 = vector.broadcast %cst_15 : f32 to vector<16x32xf32>
      %c0_16 = arith.constant 0 : index
      %c0_17 = arith.constant 0 : index
      %33 = vector.load %arg6[%c0_16, %c0_17] : memref<16x32xf32, #tpu.memory_space<vmem>>, vector<16x32xf32>
      tpu.vector_store %arg6[%c0_16, %c0_17], %32 {strides = array<i32>} : memref<16x32xf32, #tpu.memory_space<vmem>>, vector<16x32xf32>,
    } else {
    }
    %c0 = arith.constant 0 : index
    %c0_2 = arith.constant 0 : index
    %5 = vector.load %arg4[%c0, %c0_2] : memref<16x32xf32, #tpu.memory_space<vmem>>, vector<16x32xf32>
    %c0_3 = arith.constant 0 : index
    %c0_4 = arith.constant 0 : index
    %6 = vector.load %arg3[%c0_3, %c0_4] : memref<16x1xi32, #tpu.memory_space<vmem>>, vector<16x1xi32>
    %c32_i32 = arith.constant 32 : i32
    %7 = arith.muli %arg2, %c32_i32 : i32
    %8 = tpu.iota {dimensions = array<i32: 1>} : vector<1x32xi32>
    %9 = vector.broadcast %7 : i32 to vector<1x32xi32>
    %10 = arith.addi %9, %8 : vector<1x32xi32>
    %11 = vector.broadcast %10 : vector<1x32xi32> to vector<16x32xi32>
    %12 = vector.broadcast %6 : vector<16x1xi32> to vector<16x32xi32>
    %13 = arith.cmpi eq, %11, %12 : vector<16x32xi32>
    %c0_i32_5 = arith.constant 0 : i32
    %14 = vector.broadcast %c0_i32_5 : i32 to vector<16x1xi32>
    %15 = arith.cmpi ne, %6, %14 : vector<16x1xi32>
    %cst = arith.constant 0.000000e+00 : f32
    %16 = vector.shape_cast %15 : vector<16x1xi1> to vector<16x1xi1>
    %17 = vector.broadcast %16 : vector<16x1xi1> to vector<16x32xi1>
    %18 = vector.broadcast %cst : f32 to vector<16x32xf32>
    %19 = arith.select %17, %5, %18 : vector<16x32xi1>, vector<16x32xf32>
    %cst_6 = arith.constant 0.899999976 : f32
    %cst_7 = arith.constant 0.0032258064 : f32
    %20 = vector.broadcast %cst_6 : f32 to vector<16x32xf32>
    %21 = vector.broadcast %cst_7 : f32 to vector<16x32xf32>
    %22 = arith.select %13, %20, %21 : vector<16x32xi1>, vector<16x32xf32>
    %23 = arith.mulf %22, %19 : vector<16x32xf32>
    %c0_8 = arith.constant 0 : index
    %c0_9 = arith.constant 0 : index
    %24 = vector.load %arg6[%c0_8, %c0_9] : memref<16x32xf32, #tpu.memory_space<vmem>>, vector<16x32xf32>
    %25 = arith.addf %24, %23 : vector<16x32xf32>
    %c0_10 = arith.constant 0 : index
    %c0_11 = arith.constant 0 : index
    %26 = vector.load %arg6[%c0_10, %c0_11] : memref<16x32xf32, #tpu.memory_space<vmem>>, vector<16x32xf32>
    tpu.vector_store %arg6[%c0_10, %c0_11], %25 {strides = array<i32>} : memref<16x32xf32, #tpu.memory_space<vmem>>, vector<16x32xf32>,
    %c0_i32_12 = arith.constant 0 : i32
    %27 = arith.cmpi eq, %arg1, %c0_i32_12 : i32
    %c0_i32_13 = arith.constant 0 : i32
    %28 = arith.cmpi eq, %arg2, %c0_i32_13 : i32
    %29 = arith.andi %27, %28 : i1
    %30 = arith.extui %29 : i1 to i32
    %c0_i32_14 = arith.constant 0 : i32
    %31 = arith.cmpi ne, %30, %c0_i32_14 : i32
    scf.if %31 {
      %c0_15 = arith.constant 0 : index
      %c0_16 = arith.constant 0 : index
      %32 = vector.load %arg6[%c0_15, %c0_16] : memref<16x32xf32, #tpu.memory_space<vmem>>, vector<16x32xf32>
      %33 = vector.shape_cast %32 : vector<16x32xf32> to vector<1x16x32xf32>
      %cst_17 = arith.constant dense<0.000000e+00> : vector<1xf32>
      %34 = vector.multi_reduction <add>, %33, %cst_17 [1, 2] : vector<1x16x32xf32> to vector<1xf32>
      %35 = vector.shape_cast %34 : vector<1xf32> to vector<1x1x1xf32>
      %36 = vector.extract %35[0, 0, 0] : f32 from vector<1x1x1xf32>
      %cst_18 = arith.constant 0.000000e+00 : f32
      %37 = arith.subf %cst_18, %36 : f32
      %38 = vector.broadcast %37 : f32 to vector<8x128xf32>
      %c0_19 = arith.constant 0 : index
      %c0_20 = arith.constant 0 : index
      %39 = vector.load %arg5[%c0_19, %c0_20] : memref<8x128xf32, #tpu.memory_space<vmem>>, vector<8x128xf32>
      tpu.vector_store %arg5[%c0_19, %c0_20], %38 {strides = array<i32>} : memref<8x128xf32, #tpu.memory_space<vmem>>, vector<8x128xf32>,
    } else {
    }
    return
  }
  func.func @transform_0(%arg0: i32, %arg1: i32, %arg2: i32) -> (i32, i32) {
    %c1_i32 = arith.constant 1 : i32
    %0 = arith.muli %arg0, %c1_i32 : i32
    %1 = arith.addi %0, %arg1 : i32
    %c0_i32 = arith.constant 0 : i32
    %c0_i32_0 = arith.constant 0 : i32
    return %1, %c0_i32 : i32, i32
  }
  func.func @transform_1(%arg0: i32, %arg1: i32, %arg2: i32) -> (i32, i32) {
    %c1_i32 = arith.constant 1 : i32
    %0 = arith.muli %arg0, %c1_i32 : i32
    %1 = arith.addi %0, %arg1 : i32
    %c0_i32 = arith.constant 0 : i32
    %2 = arith.minsi %1, %c0_i32 : i32
    %c0_i32_0 = arith.constant 0 : i32
    return %2, %arg2 : i32, i32
  }
  func.func @transform_2(%arg0: i32, %arg1: i32, %arg2: i32) -> (i32, i32) {
    %c0_i32 = arith.constant 0 : i32
    %c0_i32_0 = arith.constant 0 : i32
    return %arg0, %c0_i32 : i32, i32
  }
}

</mosaic_0001>

<llo_original>
// kernel: tpu_custom_call.1
$region0: #{tpu_custom_call.1}
  #allocation0 [shape = 'u32[]', space=smem, size = 0x4, offset = 0x4, fixed_abs, tag = 'smem constant byte address 0x4 - core index']
  #allocation1 [shape = 'u32[72,128]{1,0:T(1,128)}', space=vmem, size = 0x9000, scoped, tag = 'internal scratch']
  #allocation2 [shape = 'f32[16,32]{1,0:T(8,128)}', space=vmem, size = 0x2000, scoped, tag = 'scratch operand']
  %s0 = inlined_call_operand.vmem [shape: s32[16,1], index: 0, kind: input, shape index: {}]
  %s1 = inlined_call_operand.vmem [shape: f32[16,32], index: 1, kind: input, shape index: {}]
  %s2 = inlined_call_operand.hbm [shape: f32[8,128], index: 2, kind: output, shape index: {}]
  %s3 = sld [smem:[#allocation0]]
  $region26: #{tpu_custom_call.1} parent=0
    _
  %s5 = ssub.s32 1, %s3
  %s6 = scalar_select 0, %s5, %s3
  $region1: #{tpu_custom_call.1} parent=0
    #allocation3 [shape = 'u8[4096]{0}', space=vmem, size = 0x1000, scoped, tag = 'output window, operand 0, single buffered']
    #allocation4 [shape = 's32[1]{0}', space=sflag, size = 0x4, scoped, tag = 'scoped memory for tpu_custom_call.1']
    %7 = vsyncpa [#allocation4], 0
    // Predicated region
    $region2: #{tpu_custom_call.1} parent=1 // pred_check
      _
    $region3: #{tpu_custom_call.1} parent=1 // pred_check_branch
      %9 = sbr.rel (0) target = $region5
    $region4: #{tpu_custom_call.1} parent=1 // pred_region
      %s10 = sadd.s32 0, 0
      %s11 = smul.u32 2, %s10
      %p12 = scmp.lt.s32.totalorder %s11, 1
      %s13 = scalar_select %p12, %s11, 1
      %s14 = smul.addr %s13, 8
      %s15 = scalar_lea.vmem %s0, %s14
      %s16 = sadd.s32 0, 0
      %s17 = smul.u32 2, %s16
    $region5: #{tpu_custom_call.1} parent=1 // pred_fallthru
      _
    // Predicated region
    $region6: #{tpu_custom_call.1} parent=1 // pred_check
      _
    $region7: #{tpu_custom_call.1} parent=1 // pred_check_branch
      %19 = sbr.rel (0) target = $region9
    $region8: #{tpu_custom_call.1} parent=1 // pred_region
      %s20 = sadd.s32 0, 0
      %p21 = scmp.lt.s32.totalorder %s20, 0
      %s22 = scalar_select %p21, %s20, 0
      %s23 = smul.u32 2, %s22
      %p24 = scmp.lt.s32.totalorder %s23, 1
      %s25 = scalar_select %p24, %s23, 1
      %s26 = smul.addr %s25, 8
      %s27 = scalar_lea.vmem %s1, %s26
      %s28 = sadd.s32 0, 0
      %p29 = scmp.lt.s32.totalorder %s28, 0
      %s30 = scalar_select %p29, %s28, 0
      %s31 = smul.u32 2, %s30
    $region9: #{tpu_custom_call.1} parent=1 // pred_fallthru
      _
    %s32 = sadd.s32 0, 0
    %s33 = smul.u32 2, %s32
    %p34 = scmp.lt.s32.totalorder %s33, 1
    %s35 = scalar_select %p34, %s33, 1
    %s36 = smul.addr %s35, 8
    %s37 = scalar_lea.vmem %s0, %s36
    %s38 = sadd.s32 0, 0
    %p39 = scmp.lt.s32.totalorder %s38, 0
    %s40 = scalar_select %p39, %s38, 0
    %s41 = smul.u32 2, %s40
    %p42 = scmp.lt.s32.totalorder %s41, 1
    %s43 = scalar_select %p42, %s41, 1
    %s44 = smul.addr %s43, 8
    %s45 = scalar_lea.vmem %s1, %s44
    %s46 = sadd.s32 0, 0
    %s47 = smul.u32 2, %s46
    %p48 = scmp.lt.s32.totalorder %s47, 1
    %s49 = scalar_select %p48, %s47, 1
    %s50 = smul.addr %s49, 8
    %s51 = scalar_lea.vmem %s0, %s50
    %s52 = sadd.s32 0, 0
    %s53 = smul.u32 2, %s52
    %s54 = sadd.s32 0, 0
    %p55 = scmp.lt.s32.totalorder %s54, 0
    %s56 = scalar_select %p55, %s54, 0
    %s57 = smul.u32 2, %s56
    %p58 = scmp.lt.s32.totalorder %s57, 1
    %s59 = scalar_select %p58, %s57, 1
    %s60 = smul.addr %s59, 8
    %s61 = scalar_lea.vmem %s1, %s60
    %s62 = sadd.s32 0, 0
    %p63 = scmp.lt.s32.totalorder %s62, 0
    %s64 = scalar_select %p63, %s62, 0
    %s65 = smul.u32 2, %s64
    %p66 = scmp.eq.s32.totalorder 0, 0
    %p67 = scmp.eq.s32.totalorder 0, 0
    %p68 = pnand %p66, %p67
    %p69 = pneg %p68
    // Predicated region
    $region10: #{tpu_custom_call.1} parent=1 // pred_check
      _
    $region11: #{tpu_custom_call.1} parent=1 // pred_check_branch
      %71 = sbr.rel (%p68) target = $region13
    $region12: #{tpu_custom_call.1} parent=1 // pred_region
      %vm72 = vcmask 261120
      %73 = vst.msk [vmem:[#allocation2] sm:$0xff] %vm72, 0.0
      %74 = vst.msk [vmem:[#allocation2 + $0x8] sm:$0xff] %vm72, 0.0
    $region13: #{tpu_custom_call.1} parent=1 // pred_fallthru
      _
    %v75 = vld [vmem:[%s61] sm:$0xff]
    %v76 = vld [vmem:[%s61 + $0x8] sm:$0xff]
    %v77 = vld [vmem:[%s51] sm:$0xff]
    %v78 = vld [vmem:[%s51 + $0x8] sm:$0xff]
    %s79 = smul.u32 0, 32
    %v80 = vlaneseq
    %v81 = vand.u32 %v80, 127
    %v82 = vstv %s79
    %v83 = vadd.s32 %v82, %v81
    %84 = vset.pattern.permute.xlu0 0
    %85 = vperm.xlu0 %84, %v77
    %v86 = vpop.permute.xlu0 %85
    %87 = vset.pattern.permute.xlu0 0
    %88 = vperm.xlu0 %87, %v78
    %v89 = vpop.permute.xlu0 %88
    %vm90 = vcmp.eq.s32.totalorder %v83, %v86
    %vm91 = vcmp.eq.s32.totalorder %v83, %v89
    %vm92 = vcmp.ne.s32.totalorder %v77, 0
    %vm93 = vcmp.ne.s32.totalorder %v78, 0
    %v94 = vsel %vm92, 1, 0
    %v95 = vsel %vm93, 1, 0
    %96 = vset.pattern.permute.xlu0 0
    %97 = vperm.xlu0 %96, %v94
    %v98 = vpop.permute.xlu0 %97
    %99 = vset.pattern.permute.xlu0 0
    %100 = vperm.xlu0 %99, %v95
    %v101 = vpop.permute.xlu0 %100
    %vm102 = vcmp.eq.s32.totalorder %v98, 1
    %vm103 = vcmp.eq.s32.totalorder %v101, 1
    %v104 = vsel %vm102, %v75, 0.0
    %v105 = vsel %vm103, %v76, 0.0
    %v106 = vsel %vm90, 0.9, 0.0032258064
    %v107 = vsel %vm91, 0.9, 0.0032258064
    %v108 = vmul.f32 %v106, %v104
    %v109 = vmul.f32 %v107, %v105
    %v110 = vld [vmem:[#allocation2] sm:$0xff]
    %v111 = vld [vmem:[#allocation2 + $0x8] sm:$0xff]
    %v112 = vadd.f32 %v110, %v108
    %v113 = vadd.f32 %v111, %v109
    %vm114 = vcmask 261120
    %115 = vst.msk [vmem:[#allocation2] sm:$0xff] %vm114, %v112
    %116 = vst.msk [vmem:[#allocation2 + $0x8] sm:$0xff] %vm114, %v113
    // Predicated region
    $region14: #{tpu_custom_call.1} parent=1 // pred_check
      _
    $region15: #{tpu_custom_call.1} parent=1 // pred_check_branch
      %118 = sbr.rel (%p68) target = $region17
    $region16: #{tpu_custom_call.1} parent=1 // pred_region
      %v119 = vld [vmem:[#allocation2] sm:$0xff]
      %v120 = vld [vmem:[#allocation2 + $0x8] sm:$0xff]
      %v121 = vsel %vm114, %v119, 0.0
      %v122 = vsel %vm114, %v120, 0.0
      %v123 = vadd.f32 %v121, %v122
      %124 = vadd.xlane.f32.xlu0 %v123
      %v125 = vpop.xlane.xlu0 %124
      %v126 = vrot.slane %v125, 4
      %v127 = vadd.f32 %v125, %v126
      %v128 = vrot.slane %v127, 2
      %v129 = vadd.f32 %v127, %v128
      %v130 = vrot.slane %v129, 1
      %v131 = vadd.f32 %v129, %v130
      %s132 = vtos %v131
      %s133 = ssub.f32 0.0, %s132
      %v134 = vstv %s133
      %135 = vst [vmem:[#allocation3] sm:$0xff] %v134
    $region17: #{tpu_custom_call.1} parent=1 // pred_fallthru
      _
    // Predicated region
    $region18: #{tpu_custom_call.1} parent=1 // pred_check
      _
    $region19: #{tpu_custom_call.1} parent=1 // pred_check_branch
      %137 = sbr.rel (0) target = $region21
    $region20: #{tpu_custom_call.1} parent=1 // pred_region
      %139 = vsyncadd [#allocation4], 0
      %s141 = sshll.u32 [#allocation3], 4
      %s142 = int_to_ptr.vmem [resolvable:$true] %s141
      %s143 = sshll.u32 %s2, 4
      %s144 = int_to_ptr.hbm [resolvable:$true] %s143
      %146 = dma.vmem_to_hbm [thread:$0]  %s142, 128, %s144, [#allocation4]
    $region21: #{tpu_custom_call.1} parent=1 // pred_fallthru
      _
    // Predicated region
    $region22: #{tpu_custom_call.1} parent=1 // pred_check
      _
    $region23: #{tpu_custom_call.1} parent=1 // pred_check_branch
      %148 = sbr.rel (0) target = $region25
    $region24: #{tpu_custom_call.1} parent=1 // pred_region
      %150 = dma.done [#allocation4], 128
    $region25: #{tpu_custom_call.1} parent=1 // pred_fallthru
      _
    %151 = vsyncpa [#allocation4], 1

</llo_original>
